<compile_context>
chip_gen: v6e
topology: v6e:2x2x1
jax: 0.10.0
libtpu: 0.0.40
codegen_flags: <defaults>
</compile_context>

<pallas_src>
import functools

import jax
import jax.numpy as jnp
from jax.experimental import pallas as pl
from jax.experimental.pallas import tpu as pltpu


def _round_up(x: int, m: int) -> int:
    return ((x + m - 1) // m) * m


def _choose_tm(m: int) -> int:
    """Row-tile size for the (M, K) @ (K, E) projection."""
    if m <= 128:
        # Single block whose second-to-last dim equals the full array dim
        # (always a legal block shape, no partial blocks, grid=(1,)).
        return m
    # Guarantee >= 2 grid steps so the "parallel" axis feeds both v7x
    # TensorCores; cap at 512 rows (>= ~85% HBM roofline per tile sweep).
    # TODO(synk): on v6e/v5e (128 MiB VMEM) tm=1024 + pl.Buffered(3) on the
    # patches spec is a further ~5-15%; not applied here to stay within a
    # single budget that is also valid on v7x's 64 MiB VMEM.
    return min(512, _round_up(-(-m // 2), 128))


def _proj_kernel(x_ref, w_ref, b_ref, o_ref):
    # x_ref: (tm, K); w_ref: (K, E); b_ref: (1, E) f32; o_ref: (tm, E).
    acc = jnp.dot(x_ref[...], w_ref[...], preferred_element_type=jnp.float32)
    o_ref[...] = (acc + b_ref[...]).astype(o_ref.dtype)


def patch_embed_proj(patches, weight, bias2d, *, tm, out_dtype):
    """patches: (M, K), weight: (K, E), bias2d: (1, E) f32 -> (M, E) out_dtype."""
    M, K = patches.shape
    E = weight.shape[1]
    grid_m = pl.cdiv(M, tm)

    in_bytes = patches.dtype.itemsize
    w_bytes = weight.dtype.itemsize
    out_bytes = jnp.dtype(out_dtype).itemsize
    cost = pl.CostEstimate(
        flops=2 * M * K * E,
        transcendentals=0,
        bytes_accessed=M * K * in_bytes + K * E * w_bytes + E * 4 + M * E * out_bytes,
    )

    return pl.pallas_call(
        _proj_kernel,
        out_shape=jax.ShapeDtypeStruct((M, E), out_dtype),
        grid_spec=pltpu.PrefetchScalarGridSpec(
            num_scalar_prefetch=0,
            grid=(grid_m,),
            in_specs=[
                pl.BlockSpec((tm, K), lambda i: (i, 0)),
                # Constant block index -> DMA'd into VMEM once and reused for
                # the whole grid.
                # TODO(synk): pipeline_mode=pl.Buffered(1) on these two specs
                # would reclaim the idle second buffer (~0.25 MiB at E=1152).
                pl.BlockSpec((K, E), lambda i: (0, 0)),
                pl.BlockSpec((1, E), lambda i: (0, 0)),
            ],
            out_specs=pl.BlockSpec((tm, E), lambda i: (i, 0)),
        ),
        compiler_params=pltpu.CompilerParams(
            dimension_semantics=("parallel",),       # shard M tiles across TCs (v7x)
            vmem_limit_bytes=32 * 1024 * 1024,       # valid budget on v5e/v6e/v7x
            allow_input_fusion=[True, False, False],  # fuse patch rearrange if legal
        ),
        cost_estimate=cost,
    )(patches, weight, bias2d)


@functools.partial(
    jax.jit,
    static_argnames=("patch_size", "embed_dim", "flatten", "compute_dtype", "out_dtype"))
def patch_embed3d_forward(x, weight, bias, *, patch_size, embed_dim,
                          flatten=True, compute_dtype=jnp.bfloat16, out_dtype=None):
    """x: (B, C, D, H, W); weight: (E, C, pd, ph, pw); bias: (E,) -> (B, N, E)."""
    if out_dtype is None:
        out_dtype = compute_dtype
    B, C, D, H, W = x.shape
    pd, ph, pw = patch_size
    E = embed_dim

    # Pad trailing spatial dims exactly like the PyTorch forward.
    pad_d = (pd - D % pd) % pd
    pad_h = (ph - H % ph) % ph
    pad_w = (pw - W % pw) % pw
    if pad_d or pad_h or pad_w:
        x = jnp.pad(x, ((0, 0), (0, 0), (0, pad_d), (0, pad_h), (0, pad_w)))
    Dp, Hp, Wp = D + pad_d, H + pad_h, W + pad_w
    Do, Ho, Wo = Dp // pd, Hp // ph, Wp // pw

    # Patch extraction (pure data movement); K order (C, pd, ph, pw) matches
    # the Conv3d contraction.  Done in compute_dtype (bf16 default) and marked
    # fusible into the pallas input DMA via allow_input_fusion so XLA can skip
    # materializing it in HBM.
    # TODO(synk): full in-VMEM relayout (grid over (B, Do, Ho) with the rank-6
    # transpose inside the kernel) would remove the rearrange entirely, but
    # Mosaic lowering of sub-(8,128) rank-6 transposes is not reliable yet.
    K = C * pd * ph * pw
    M = B * Do * Ho * Wo
    xp = x.astype(compute_dtype).reshape(B, C, Do, pd, Ho, ph, Wo, pw)
    xp = xp.transpose(0, 2, 4, 6, 1, 3, 5, 7)         # (B, Do, Ho, Wo, C, pd, ph, pw)
    patches = xp.reshape(M, K)

    # No M/E padding: block dims equal full array dims (or are 128-aligned),
    # and Pallas handles a partial last row-block, so no post-kernel slice.
    tm = _choose_tm(M)
    w2d = weight.reshape(E, K).T.astype(compute_dtype)   # (K, E)
    b2d = bias.reshape(1, E).astype(jnp.float32)

    out = patch_embed_proj(patches, w2d, b2d, tm=tm, out_dtype=out_dtype)
    out = out.reshape(B, Do * Ho * Wo, E)                 # free reshape, no copy
    if not flatten:
        out = out.reshape(B, Do, Ho, Wo, E).transpose(0, 4, 1, 2, 3)
    return out


class PatchEmbed3D:
    """JAX/Pallas port of OpenSora PatchEmbed3D (norm_layer=None)."""

    def __init__(self, patch_size=(2, 4, 4), in_chans=3, embed_dim=96,
                 norm_layer=None, flatten=True, compute_dtype=jnp.bfloat16,
                 out_dtype=None, key=None):
        assert norm_layer is None  # TODO(synk): norm_layer unused in default config
        self.patch_size = tuple(patch_size)
        self.in_chans = in_chans
        self.embed_dim = embed_dim
        self.flatten = flatten
        self.compute_dtype = compute_dtype
        self.out_dtype = out_dtype
        if key is None:
            key = jax.random.PRNGKey(0)
        kw, kb = jax.random.split(key)
        pd, ph, pw = self.patch_size
        fan_in = in_chans * pd * ph * pw
        bound = 1.0 / float(fan_in) ** 0.5
        # Conv3d weight layout: (embed_dim, in_chans, pd, ph, pw), uniform(-b, b).
        self.weight = jax.random.uniform(
            kw, (embed_dim, in_chans, pd, ph, pw), jnp.float32, -bound, bound)
        self.bias = jax.random.uniform(kb, (embed_dim,), jnp.float32, -bound, bound)

    def __call__(self, x):
        return patch_embed3d_forward(
            x, self.weight, self.bias,
            patch_size=self.patch_size, embed_dim=self.embed_dim,
            flatten=self.flatten, compute_dtype=self.compute_dtype,
            out_dtype=self.out_dtype)


def _reference(x, weight, bias, patch_size):
    """Pure-JAX reference: lax.conv_general_dilated with stride == kernel."""
    pd, ph, pw = patch_size
    out = jax.lax.conv_general_dilated(
        x, weight, window_strides=(pd, ph, pw), padding="VALID",
        dimension_numbers=("NCDHW", "OIDHW", "NCDHW"))
    out = out + bias.reshape(1, -1, 1, 1, 1)
    B, E = out.shape[0], out.shape[1]
    return out.reshape(B, E, -1).transpose(0, 2, 1)


if __name__ == "__main__":
    key = jax.random.PRNGKey(0)
    kx, kp, kx2 = jax.random.split(key, 3)

    # Small shapes consistent with the module: B=2, C=3, D=4, H=W=8.
    B, C, D, H, W = 2, 3, 4, 8, 8
    patch_size = (2, 4, 4)
    embed_dim = 96

    x = jax.random.normal(kx, (B, C, D, H, W), jnp.float32)

    # bf16 compute + bf16 output path (default, bandwidth-optimized).
    mod = PatchEmbed3D(patch_size=patch_size, in_chans=C, embed_dim=embed_dim, key=kp)
    out = jax.block_until_ready(mod(x))
    ref = _reference(x, mod.weight, mod.bias, patch_size)
    assert out.shape == ref.shape == (B, (D // 2) * (H // 4) * (W // 4), embed_dim)
    assert jnp.allclose(out.astype(jnp.float32), ref, atol=7e-2, rtol=5e-2), \
        float(jnp.max(jnp.abs(out.astype(jnp.float32) - ref)))

    # f32 compute path (same weights: same key), tighter tolerance.
    mod_f32 = PatchEmbed3D(patch_size=patch_size, in_chans=C, embed_dim=embed_dim,
                           compute_dtype=jnp.float32, key=kp)
    out_f32 = jax.block_until_ready(mod_f32(x))
    assert out_f32.dtype == jnp.float32
    assert jnp.allclose(out_f32, ref, atol=2e-2, rtol=2e-2), \
        float(jnp.max(jnp.abs(out_f32 - ref)))

    # Non-divisible spatial dims exercise the forward's padding path
    # (M = 36 -> single partial-free full-dim block, E = 96 lane-masked stores).
    x2 = jax.random.normal(kx2, (B, C, 3, 9, 10), jnp.float32)
    out2 = jax.block_until_ready(mod_f32(x2))
    x2p = jnp.pad(x2, ((0, 0), (0, 0), (0, 1), (0, 3), (0, 2)))
    ref2 = _reference(x2p, mod_f32.weight, mod_f32.bias, patch_size)
    assert out2.shape == ref2.shape
    assert jnp.allclose(out2, ref2, atol=2e-2, rtol=2e-2), \
        float(jnp.max(jnp.abs(out2 - ref2)))

    print("KERNEL_OK")
</pallas_src>

<mosaic_0001>
module attributes {stable_mosaic.version = 11 : i64} {
  func.func @_proj_kernel(%arg0: i32, %arg1: memref<16x96xbf16, #tpu.memory_space<vmem>>, %arg2: memref<96x96xbf16, #tpu.memory_space<vmem>>, %arg3: memref<1x96xf32, #tpu.memory_space<vmem>>, %arg4: memref<16x96xbf16, #tpu.memory_space<vmem>>) attributes {dimension_semantics = [#tpu.dimension_semantics<parallel>], iteration_bounds = array<i64: 1>, scalar_prefetch = 0 : i64, scratch_operands = 0 : i64, tpu.core_type = #tpu.core_type<tc>, window_params = [{transform_indices = @transform_0, window_bounds = array<i64: 16, 96>}, {pipeline_mode = #tpu.pipeline_mode<synchronous>, transform_indices = @transform_1, window_bounds = array<i64: 96, 96>}, {pipeline_mode = #tpu.pipeline_mode<synchronous>, transform_indices = @transform_2, window_bounds = array<i64: 1, 96>}, {transform_indices = @transform_3, window_bounds = array<i64: 16, 96>}]} {
    %c0 = arith.constant 0 : index
    %c0_0 = arith.constant 0 : index
    %0 = vector.load %arg1[%c0, %c0_0] : memref<16x96xbf16, #tpu.memory_space<vmem>>, vector<16x96xbf16>
    %c0_1 = arith.constant 0 : index
    %c0_2 = arith.constant 0 : index
    %1 = vector.load %arg2[%c0_1, %c0_2] : memref<96x96xbf16, #tpu.memory_space<vmem>>, vector<96x96xbf16>
    %cst = arith.constant dense<0.000000e+00> : vector<16x96xf32>
    %2 = tpu.matmul %0, %1, %cst {dimension_numbers = #tpu.dot_dimension_numbers<[1], [0], [0], [1], [0, 0, 1, 1], [], []>} : vector<16x96xbf16>, vector<96x96xbf16>, vector<16x96xf32> -> vector<16x96xf32>
    %c0_3 = arith.constant 0 : index
    %c0_4 = arith.constant 0 : index
    %3 = vector.load %arg3[%c0_3, %c0_4] : memref<1x96xf32, #tpu.memory_space<vmem>>, vector<1x96xf32>
    %4 = vector.broadcast %3 : vector<1x96xf32> to vector<16x96xf32>
    %5 = arith.addf %2, %4 : vector<16x96xf32>
    %6 = arith.truncf %5 : vector<16x96xf32> to vector<16x96xbf16>
    %c0_5 = arith.constant 0 : index
    %c0_6 = arith.constant 0 : index
    %7 = vector.load %arg4[%c0_5, %c0_6] : memref<16x96xbf16, #tpu.memory_space<vmem>>, vector<16x96xbf16>
    tpu.vector_store %arg4[%c0_5, %c0_6], %6 {strides = array<i32>} : memref<16x96xbf16, #tpu.memory_space<vmem>>, vector<16x96xbf16>,
    return
  }
  func.func @transform_0(%arg0: i32) -> (i32, i32) {
    %c0_i32 = arith.constant 0 : i32
    %c0_i32_0 = arith.constant 0 : i32
    return %arg0, %c0_i32 : i32, i32
  }
  func.func @transform_1(%arg0: i32) -> (i32, i32) {
    %c0_i32 = arith.constant 0 : i32
    %c0_i32_0 = arith.constant 0 : i32
    %c0_i32_1 = arith.constant 0 : i32
    return %c0_i32, %c0_i32_0 : i32, i32
  }
  func.func @transform_2(%arg0: i32) -> (i32, i32) {
    %c0_i32 = arith.constant 0 : i32
    %c0_i32_0 = arith.constant 0 : i32
    %c0_i32_1 = arith.constant 0 : i32
    return %c0_i32, %c0_i32_0 : i32, i32
  }
  func.func @transform_3(%arg0: i32) -> (i32, i32) {
    %c0_i32 = arith.constant 0 : i32
    %c0_i32_0 = arith.constant 0 : i32
    return %arg0, %c0_i32 : i32, i32
  }
}

</mosaic_0001>

<llo_original>
// kernel: patch_embed3d_forward.1
$region0: #{patch_embed3d_forward.1}
  #allocation0 [shape = 'u32[]', space=smem, size = 0x4, offset = 0x4, fixed_abs, tag = 'smem constant byte address 0x4 - core index']
  #allocation1 [shape = 'u32[144,128]{1,0:T(1,128)}', space=vmem, size = 0x12000, scoped, tag = 'internal scratch']
  %s0 = inlined_call_operand.vmem [shape: bf16[16,96], index: 0, kind: input, shape index: {}]
  %s1 = inlined_call_operand.vmem [shape: bf16[96,96], index: 1, kind: input, shape index: {}]
  %s2 = inlined_call_operand.vmem [shape: f32[1,96], index: 2, kind: input, shape index: {}]
  %s3 = inlined_call_operand.hbm [shape: bf16[16,96], index: 3, kind: output, shape index: {}]
  %s4 = sld [smem:[#allocation0]]
  $region22: #{patch_embed3d_forward.1} parent=0
    _
  %s6 = ssub.s32 1, %s4
  %s7 = scalar_select 0, %s6, %s4
  $region1: #{patch_embed3d_forward.1} parent=0
    #allocation2 [shape = 'u8[4096]{0}', space=vmem, size = 0x1000, scoped, tag = 'output window, operand 0, single buffered']
    #allocation3 [shape = 's32[1]{0}', space=sflag, size = 0x4, scoped, tag = 'scoped memory for patch_embed3d_forward.1']
    %8 = vsyncpa [#allocation3], 0
    // Predicated region
    $region2: #{patch_embed3d_forward.1} parent=1 // pred_check
      _
    $region3: #{patch_embed3d_forward.1} parent=1 // pred_check_branch
      %10 = sbr.rel (0) target = $region5
    $region4: #{patch_embed3d_forward.1} parent=1 // pred_region
      _
    $region5: #{patch_embed3d_forward.1} parent=1 // pred_fallthru
      _
    // Predicated region
    $region6: #{patch_embed3d_forward.1} parent=1 // pred_check
      _
    $region7: #{patch_embed3d_forward.1} parent=1 // pred_check_branch
      %12 = sbr.rel (0) target = $region9
    $region8: #{patch_embed3d_forward.1} parent=1 // pred_region
      _
    $region9: #{patch_embed3d_forward.1} parent=1 // pred_fallthru
      _
    // Predicated region
    $region10: #{patch_embed3d_forward.1} parent=1 // pred_check
      _
    $region11: #{patch_embed3d_forward.1} parent=1 // pred_check_branch
      %14 = sbr.rel (0) target = $region13
    $region12: #{patch_embed3d_forward.1} parent=1 // pred_region
      _
    $region13: #{patch_embed3d_forward.1} parent=1 // pred_fallthru
      _
    %v16 = vld [vmem:[%s0] sm:$0xf]
    %v17 = vld [vmem:[%s0 + $0x4] sm:$0xf]
    %v18 = vld [vmem:[%s1] sm:$0xf]
    %v19 = vld [vmem:[%s1 + $0x4] sm:$0xf]
    %v20 = vld [vmem:[%s1 + $0x8] sm:$0xf]
    %v21 = vld [vmem:[%s1 + $0xc] sm:$0xf]
    %v22 = vld [vmem:[%s1 + $0x10] sm:$0xf]
    %v23 = vld [vmem:[%s1 + $0x14] sm:$0xf]
    %v24 = vld [vmem:[%s1 + $0x18] sm:$0xf]
    %v25 = vld [vmem:[%s1 + $0x1c] sm:$0xf]
    %v26 = vld [vmem:[%s1 + $0x20] sm:$0xf]
    %v27 = vld [vmem:[%s1 + $0x24] sm:$0xf]
    %v28 = vld [vmem:[%s1 + $0x28] sm:$0xf]
    %v29 = vld [vmem:[%s1 + $0x2c] sm:$0xf]
    %v30 = vld [vmem:[%s2] sm:$0x1]
    %v32 = vlaneseq
    %v33 = vshrl.u32 %v32, 7
    %v34 = vsub.s32 0, %v33
    %v35 = vrot.slane %v30, %v34
    %v39 = vunpack.c.l.b16 %v16
    %v40 = vunpack.c.l.b16 %v17
    %v41 = vpack.c.b16 %v40, %v39
    %v54 = vunpack.c.l.b16 %v18
    %v55 = vunpack.c.l.b16 %v19
    %v56 = vunpack.c.l.b16 %v20
    %v57 = vunpack.c.l.b16 %v21
    %v58 = vunpack.c.l.b16 %v22
    %v59 = vunpack.c.l.b16 %v23
    %v60 = vunpack.c.l.b16 %v24
    %v61 = vunpack.c.l.b16 %v25
    %v62 = vunpack.c.l.b16 %v26
    %v63 = vunpack.c.l.b16 %v27
    %v64 = vunpack.c.l.b16 %v28
    %v65 = vunpack.c.l.b16 %v29
    %v66 = vpack.c.b16 %v55, %v54
    %v67 = vpack.c.b16 %v57, %v56
    %v68 = vpack.c.b16 %v59, %v58
    %v69 = vpack.c.b16 %v61, %v60
    %v70 = vpack.c.b16 %v63, %v62
    %v71 = vpack.c.b16 %v65, %v64
    %vm78 = vcmask 785408
    %v80 = vsel %vm78, %v41, 0
    %82 = vmatprep.subr.bf16.mxu0 0
    %83 = vmatpush1.bf16.msra.mxu0 0
    %84 = vmatprep.subr.bf16.mxu0 0
    %85 = vmatpush1.bf16.msra.mxu0 0
    %86 = vmatprep.subr.bf16.mxu0 0
    %87 = vmatpush1.bf16.msra.mxu0 %v71
    %88 = vmatprep.subr.bf16.mxu0 0
    %89 = vmatpush1.bf16.msra.mxu0 %v70
    %90 = vmatprep.subr.bf16.mxu0 0
    %91 = vmatpush1.bf16.msra.mxu0 %v69
    %92 = vmatprep.subr.bf16.mxu0 0
    %93 = vmatpush1.bf16.msra.mxu0 %v68
    %94 = vmatprep.subr.bf16.mxu0 0
    %95 = vmatpush1.bf16.msra.mxu0 %v67
    %96 = vmatprep.subr.bf16.mxu0 0
    %97 = vmatpush1.bf16.msra.mxu0 %v66
    %98 = vmatprep.subr.bf16.mxu0 0
    %99 = vmatpush2.bf16.msra.mxu0 0
    %100 = vmatprep.subr.bf16.mxu0 0
    %101 = vmatpush2.bf16.msra.mxu0 0
    %102 = vmatprep.subr.bf16.mxu0 0
    %103 = vmatpush2.bf16.msra.mxu0 0
    %104 = vmatprep.subr.bf16.mxu0 0
    %105 = vmatpush2.bf16.msra.mxu0 0
    %106 = vmatprep.subr.bf16.mxu0 0
    %107 = vmatpush2.bf16.msra.mxu0 0
    %108 = vmatprep.subr.bf16.mxu0 0
    %109 = vmatpush2.bf16.msra.mxu0 0
    %110 = vmatprep.subr.bf16.mxu0 0
    %111 = vmatpush2.bf16.msra.mxu0 0
    %112 = vmatprep.subr.bf16.mxu0 0
    %113 = vmatpush2.bf16.msra.mxu0 0
    %114 = vmatprep.mubr.bf16.mxu0 0
    %115 = vmatmul.mubr.bf16.gmra.mxu0 %v80
    %v116 = vpop.f32.mrf.mxu0
    %v117 = vadd.f32 %v35, %v116
    %v118 = vpop.f32.mrf.mxu0
    %v119 = vpop.f32.mrf.mxu0
    %v120 = vadd.f32 %v35, %v119
    %v121 = vpop.f32.mrf.mxu0
    %122 = vdwg.mxu0
    %v123 = vpack.c.bf16 %v120, %v117
    %v125 = vunpack.c.l.b16 %v123
    %v126 = vunpack.c.h.b16 %v123
    %v127 = vpack.c.b16 %v125, %v125
    %v128 = vpack.c.b16 %v126, %v126
    %vm131 = vcmask 781312
    %132 = vst.msk [vmem:[#allocation2] sm:$0xf] %vm131, %v127
    %133 = vst.msk [vmem:[#allocation2 + $0x4] sm:$0xf] %vm131, %v128
    // Predicated region
    $region14: #{patch_embed3d_forward.1} parent=1 // pred_check
      _
    $region15: #{patch_embed3d_forward.1} parent=1 // pred_check_branch
      %135 = sbr.rel (0) target = $region17
    $region16: #{patch_embed3d_forward.1} parent=1 // pred_region
      %s137 = ssub.s32 128, 128
      %138 = vsyncadd [#allocation3], %s137
      %s139 = sshll.u32 [#allocation2], 4
      %s140 = int_to_ptr.vmem [resolvable:$true] %s139
      %145 = dma.vmem_to_hbm [thread:$0]  %s140, 128, %s3, [#allocation3], 64, 64, 4
    $region17: #{patch_embed3d_forward.1} parent=1 // pred_fallthru
      _
    // Predicated region
    $region18: #{patch_embed3d_forward.1} parent=1 // pred_check
      _
    $region19: #{patch_embed3d_forward.1} parent=1 // pred_check_branch
      %147 = sbr.rel (0) target = $region21
    $region20: #{patch_embed3d_forward.1} parent=1 // pred_region
      %148 = dma.done [#allocation3], 128
    $region21: #{patch_embed3d_forward.1} parent=1 // pred_fallthru
      _
    %149 = vsyncpa [#allocation3], 1

</llo_original>
